<compile_context>
chip_gen: v7x
topology: tpu7x:2x2x1
jax: 0.10.0
libtpu: 0.0.40
codegen_flags: <defaults>
</compile_context>

<pallas_src>
import math

import jax
import jax.numpy as jnp
import numpy as np
from jax.experimental import pallas as pl
from jax.experimental.pallas import tpu as pltpu


def _round_up(x, m):
    return ((x + m - 1) // m) * m


# --------------------------------- kernel ------------------------------------
def feedforward_kernel(x_ref, w1_ref, b1_ref, w2_ref, b2_ref, o_ref, acc_ref):
    # x: (tm, Dp) bf16   w1: (Dp, tf) bf16   b1: (1, tf) f32
    # w2: (tf, Dp) bf16  b2: (1, Dp) f32     o: (tm, Dp) f32   acc: (tm, Dp) f32
    f = pl.program_id(1)

    @pl.when(f == 0)
    def _init():
        acc_ref[...] = jnp.zeros_like(acc_ref)

    # bf16 operands, f32 accumulation on the MXU; bias + ReLU epilogue in f32.
    h = jnp.dot(x_ref[...], w1_ref[...], preferred_element_type=jnp.float32)
    h = jnp.maximum(h + b1_ref[...], 0.0)          # ReLU; dropout == identity (eval mode)
    acc_ref[...] += jnp.dot(h.astype(jnp.bfloat16), w2_ref[...],
                            preferred_element_type=jnp.float32)

    @pl.when(f == pl.num_programs(1) - 1)
    def _finalize():
        o_ref[...] = (acc_ref[...] + b2_ref[...]).astype(o_ref.dtype)


# --------------------------- one-time param prep ------------------------------
def prepare_params(w1, b1, w2, b2, *, f_block=1024):
    """Pad + cast parameters once (keeps the per-call hot path to x only).

    w1: (D, F), b1: (F,), w2: (F, D), b2: (D,)  -- weights stored (in, out).
    """
    D, F = w1.shape
    Dp = _round_up(D, 128)
    tf = min(_round_up(F, 128), _round_up(f_block, 128))
    Fp = _round_up(F, tf)
    w1_p = jnp.zeros((Dp, Fp), jnp.bfloat16).at[:D, :F].set(w1.astype(jnp.bfloat16))
    b1_p = jnp.zeros((1, Fp), jnp.float32).at[0, :F].set(b1.astype(jnp.float32))
    w2_p = jnp.zeros((Fp, Dp), jnp.bfloat16).at[:F, :D].set(w2.astype(jnp.bfloat16))
    b2_p = jnp.zeros((1, Dp), jnp.float32).at[0, :D].set(b2.astype(jnp.float32))
    return w1_p, b1_p, w2_p, b2_p


# --------------------------------- wrapper ------------------------------------
def feedforward_forward(x, w1_p, b1_p, w2_p, b2_p, *, block_rows=512, f_block=1024):
    """x: (..., D) float32; prepared params from prepare_params()."""
    orig_shape = x.shape
    D = orig_shape[-1]
    Dp, Fp = w1_p.shape
    M = int(np.prod(orig_shape[:-1]))

    # Hidden-dim tile (matches prepare_params padding).
    tf = min(Fp, _round_up(f_block, 128))
    assert Fp % tf == 0
    n_f = Fp // tf

    # Row tile: multiple of 8, <= block_rows, and aim for >=2 row tiles (v7x megacore).
    block_rows = max(8, _round_up(block_rows, 8))
    tm = min(block_rows, _round_up(max((M + 1) // 2, 8), 8))
    n_i = pl.cdiv(M, tm)

    # Only the feature/contraction dim is zero-padded; ragged last row tile is masked on write.
    x2 = x.reshape(M, D)
    if Dp != D:
        x2 = jnp.pad(x2, ((0, 0), (0, Dp - D)))
    x_b = x2.astype(jnp.bfloat16)

    # Explicit scoped-VMEM budget: double-buffered pipelined tiles + f32 accumulator.
    need = (2 * tm * Dp * 2        # x (bf16)
            + 2 * Dp * tf * 2      # w1 (bf16)
            + 2 * 8 * tf * 4       # b1 (f32, sublane-padded)
            + 2 * tf * Dp * 2      # w2 (bf16)
            + 2 * 8 * Dp * 4       # b2 (f32)
            + 2 * tm * Dp * 4      # out (f32)
            + tm * Dp * 4)         # acc scratch (f32)
    vmem_limit = int(min(max(2 * need, 16 * 2**20), 64 * 2**20))

    out = pl.pallas_call(
        feedforward_kernel,
        out_shape=jax.ShapeDtypeStruct((M, Dp), jnp.float32),
        grid_spec=pltpu.PrefetchScalarGridSpec(
            num_scalar_prefetch=0,
            grid=(n_i, n_f),
            in_specs=[
                pl.BlockSpec((tm, Dp), lambda i, f: (i, 0)),   # activations: tiled over rows
                pl.BlockSpec((Dp, tf), lambda i, f: (0, f)),   # w1: streamed over F
                pl.BlockSpec((1, tf), lambda i, f: (0, f)),    # b1: streamed over F
                pl.BlockSpec((tf, Dp), lambda i, f: (f, 0)),   # w2: streamed over F
                pl.BlockSpec((1, Dp), lambda i, f: (0, 0)),    # b2: constant/resident
            ],
            out_specs=pl.BlockSpec((tm, Dp), lambda i, f: (i, 0)),
            scratch_shapes=[pltpu.VMEM((tm, Dp), jnp.float32)],
        ),
        compiler_params=pltpu.CompilerParams(
            dimension_semantics=("parallel", "arbitrary"),
            vmem_limit_bytes=vmem_limit,
        ),
    )(x_b, w1_p, b1_p, w2_p, b2_p)

    return out[:, :D].reshape(orig_shape)


# --------------------------- deterministic params ------------------------------
def init_params(key, d_model, d_ff):
    # Matches torch.nn.Linear default init: U(-1/sqrt(fan_in), 1/sqrt(fan_in)).
    k1, k2, k3, k4 = jax.random.split(key, 4)
    b_in = 1.0 / math.sqrt(d_model)
    b_ff = 1.0 / math.sqrt(d_ff)
    w1 = jax.random.uniform(k1, (d_model, d_ff), jnp.float32, -b_in, b_in)
    b1 = jax.random.uniform(k2, (d_ff,), jnp.float32, -b_in, b_in)
    w2 = jax.random.uniform(k3, (d_ff, d_model), jnp.float32, -b_ff, b_ff)
    b2 = jax.random.uniform(k4, (d_model,), jnp.float32, -b_ff, b_ff)
    return w1, b1, w2, b2


# ------------------------------ pure-JAX reference -----------------------------
def reference(x, w1, b1, w2, b2):
    h = jax.nn.relu(jnp.matmul(x, w1) + b1)
    return jnp.matmul(h, w2) + b2


# ------------------------------------ main --------------------------------------
if __name__ == "__main__":
    B, S, D, d_ff = 2, 8, 32, 512
    key = jax.random.PRNGKey(0)
    kx, kw = jax.random.split(key)
    x = jax.random.normal(kx, (B, S, D), jnp.float32)
    w1, b1, w2, b2 = init_params(kw, D, d_ff)

    params = prepare_params(w1, b1, w2, b2)
    fwd = jax.jit(lambda xx: feedforward_forward(xx, *params))
    out = fwd(x)
    jax.block_until_ready(out)

    ref = reference(x, w1, b1, w2, b2)
    assert np.isfinite(np.asarray(out)).all()
    err = float(jnp.max(jnp.abs(out - ref)))
    # bf16 operands + f32 accumulation vs. pure-f32 reference: ~1e-2-scale max abs error here.
    assert err < 5e-2, err
    print("KERNEL_OK")
</pallas_src>

<mosaic_0001>
module attributes {stable_mosaic.version = 11 : i64} {
  func.func @feedforward_kernel(%arg0: i32, %arg1: i32, %arg2: memref<8x128xbf16, #tpu.memory_space<vmem>>, %arg3: memref<128x512xbf16, #tpu.memory_space<vmem>>, %arg4: memref<1x512xf32, #tpu.memory_space<vmem>>, %arg5: memref<512x128xbf16, #tpu.memory_space<vmem>>, %arg6: memref<1x128xf32, #tpu.memory_space<vmem>>, %arg7: memref<8x128xf32, #tpu.memory_space<vmem>>, %arg8: memref<8x128xf32, #tpu.memory_space<vmem>>) attributes {dimension_semantics = [#tpu.dimension_semantics<parallel>, #tpu.dimension_semantics<arbitrary>], iteration_bounds = array<i64: 2, 1>, scalar_prefetch = 0 : i64, scratch_operands = 1 : i64, tpu.core_type = #tpu.core_type<tc>, window_params = [{transform_indices = @transform_0, window_bounds = array<i64: 8, 128>}, {transform_indices = @transform_1, window_bounds = array<i64: 128, 512>}, {transform_indices = @transform_2, window_bounds = array<i64: 1, 512>}, {transform_indices = @transform_3, window_bounds = array<i64: 512, 128>}, {pipeline_mode = #tpu.pipeline_mode<synchronous>, transform_indices = @transform_4, window_bounds = array<i64: 1, 128>}, {transform_indices = @transform_5, window_bounds = array<i64: 8, 128>}]} {
    %c0_i32 = arith.constant 0 : i32
    %0 = arith.cmpi eq, %arg1, %c0_i32 : i32
    %1 = arith.extui %0 : i1 to i32
    %c0_i32_0 = arith.constant 0 : i32
    %2 = arith.cmpi ne, %1, %c0_i32_0 : i32
    scf.if %2 {
      %cst_16 = arith.constant 0.000000e+00 : f32
      %20 = vector.broadcast %cst_16 : f32 to vector<8x128xf32>
      %c0_17 = arith.constant 0 : index
      %c0_18 = arith.constant 0 : index
      %21 = vector.load %arg8[%c0_17, %c0_18] : memref<8x128xf32, #tpu.memory_space<vmem>>, vector<8x128xf32>
      tpu.vector_store %arg8[%c0_17, %c0_18], %20 {strides = array<i32>} : memref<8x128xf32, #tpu.memory_space<vmem>>, vector<8x128xf32>,
    } else {
    }
    %c0 = arith.constant 0 : index
    %c0_1 = arith.constant 0 : index
    %3 = vector.load %arg2[%c0, %c0_1] : memref<8x128xbf16, #tpu.memory_space<vmem>>, vector<8x128xbf16>
    %c0_2 = arith.constant 0 : index
    %c0_3 = arith.constant 0 : index
    %4 = vector.load %arg3[%c0_2, %c0_3] : memref<128x512xbf16, #tpu.memory_space<vmem>>, vector<128x512xbf16>
    %cst = arith.constant dense<0.000000e+00> : vector<8x512xf32>
    %5 = tpu.matmul %3, %4, %cst {dimension_numbers = #tpu.dot_dimension_numbers<[1], [0], [0], [1], [0, 0, 1, 1], [], []>} : vector<8x128xbf16>, vector<128x512xbf16>, vector<8x512xf32> -> vector<8x512xf32>
    %c0_4 = arith.constant 0 : index
    %c0_5 = arith.constant 0 : index
    %6 = vector.load %arg4[%c0_4, %c0_5] : memref<1x512xf32, #tpu.memory_space<vmem>>, vector<1x512xf32>
    %7 = vector.broadcast %6 : vector<1x512xf32> to vector<8x512xf32>
    %8 = arith.addf %5, %7 : vector<8x512xf32>
    %cst_6 = arith.constant 0.000000e+00 : f32
    %9 = vector.broadcast %cst_6 : f32 to vector<8x512xf32>
    %10 = arith.maximumf %8, %9 : vector<8x512xf32>
    %c0_7 = arith.constant 0 : index
    %c0_8 = arith.constant 0 : index
    %11 = vector.load %arg8[%c0_7, %c0_8] : memref<8x128xf32, #tpu.memory_space<vmem>>, vector<8x128xf32>
    %12 = arith.truncf %10 : vector<8x512xf32> to vector<8x512xbf16>
    %c0_9 = arith.constant 0 : index
    %c0_10 = arith.constant 0 : index
    %13 = vector.load %arg5[%c0_9, %c0_10] : memref<512x128xbf16, #tpu.memory_space<vmem>>, vector<512x128xbf16>
    %cst_11 = arith.constant dense<0.000000e+00> : vector<8x128xf32>
    %14 = tpu.matmul %12, %13, %cst_11 {dimension_numbers = #tpu.dot_dimension_numbers<[1], [0], [0], [1], [0, 0, 1, 1], [], []>} : vector<8x512xbf16>, vector<512x128xbf16>, vector<8x128xf32> -> vector<8x128xf32>
    %15 = arith.addf %11, %14 : vector<8x128xf32>
    %c0_12 = arith.constant 0 : index
    %c0_13 = arith.constant 0 : index
    %16 = vector.load %arg8[%c0_12, %c0_13] : memref<8x128xf32, #tpu.memory_space<vmem>>, vector<8x128xf32>
    tpu.vector_store %arg8[%c0_12, %c0_13], %15 {strides = array<i32>} : memref<8x128xf32, #tpu.memory_space<vmem>>, vector<8x128xf32>,
    %c0_i32_14 = arith.constant 0 : i32
    %17 = arith.cmpi eq, %arg1, %c0_i32_14 : i32
    %18 = arith.extui %17 : i1 to i32
    %c0_i32_15 = arith.constant 0 : i32
    %19 = arith.cmpi ne, %18, %c0_i32_15 : i32
    scf.if %19 {
      %c0_16 = arith.constant 0 : index
      %c0_17 = arith.constant 0 : index
      %20 = vector.load %arg8[%c0_16, %c0_17] : memref<8x128xf32, #tpu.memory_space<vmem>>, vector<8x128xf32>
      %c0_18 = arith.constant 0 : index
      %c0_19 = arith.constant 0 : index
      %21 = vector.load %arg6[%c0_18, %c0_19] : memref<1x128xf32, #tpu.memory_space<vmem>>, vector<1x128xf32>
      %22 = vector.broadcast %21 : vector<1x128xf32> to vector<8x128xf32>
      %23 = arith.addf %20, %22 : vector<8x128xf32>
      %c0_20 = arith.constant 0 : index
      %c0_21 = arith.constant 0 : index
      %24 = vector.load %arg7[%c0_20, %c0_21] : memref<8x128xf32, #tpu.memory_space<vmem>>, vector<8x128xf32>
      tpu.vector_store %arg7[%c0_20, %c0_21], %23 {strides = array<i32>} : memref<8x128xf32, #tpu.memory_space<vmem>>, vector<8x128xf32>,
    } else {
    }
    return
  }
  func.func @transform_0(%arg0: i32, %arg1: i32) -> (i32, i32) {
    %c0_i32 = arith.constant 0 : i32
    %c0_i32_0 = arith.constant 0 : i32
    return %arg0, %c0_i32 : i32, i32
  }
  func.func @transform_1(%arg0: i32, %arg1: i32) -> (i32, i32) {
    %c0_i32 = arith.constant 0 : i32
    %c0_i32_0 = arith.constant 0 : i32
    return %c0_i32, %arg1 : i32, i32
  }
  func.func @transform_2(%arg0: i32, %arg1: i32) -> (i32, i32) {
    %c0_i32 = arith.constant 0 : i32
    %c0_i32_0 = arith.constant 0 : i32
    return %c0_i32, %arg1 : i32, i32
  }
  func.func @transform_3(%arg0: i32, %arg1: i32) -> (i32, i32) {
    %c0_i32 = arith.constant 0 : i32
    %c0_i32_0 = arith.constant 0 : i32
    return %arg1, %c0_i32 : i32, i32
  }
  func.func @transform_4(%arg0: i32, %arg1: i32) -> (i32, i32) {
    %c0_i32 = arith.constant 0 : i32
    %c0_i32_0 = arith.constant 0 : i32
    %c0_i32_1 = arith.constant 0 : i32
    return %c0_i32, %c0_i32_0 : i32, i32
  }
  func.func @transform_5(%arg0: i32, %arg1: i32) -> (i32, i32) {
    %c0_i32 = arith.constant 0 : i32
    %c0_i32_0 = arith.constant 0 : i32
    return %arg0, %c0_i32 : i32, i32
  }
}

</mosaic_0001>

<llo_original>
// kernel: _lambda_.1
$region0: #{_lambda_.1}
  #allocation0 [shape = 'u32[]', space=smem, size = 0x4, offset = 0x4, fixed_abs, tag = 'smem constant byte address 0x4 - core index']
  #allocation1 [shape = 'u32[144,128]{1,0:T(1,128)}', space=vmem, size = 0x12000, scoped, tag = 'internal scratch']
  #allocation2 [shape = 'f32[8,128]{1,0:T(8,128)}', space=vmem, size = 0x1000, scoped, tag = 'scratch operand']
  %s0 = inlined_call_operand.vmem [shape: bf16[16,128], index: 0, kind: input, shape index: {}]
  %s1 = inlined_call_operand.vmem [shape: bf16[128,512], index: 1, kind: input, shape index: {}]
  %s2 = inlined_call_operand.vmem [shape: f32[1,512], index: 2, kind: input, shape index: {}]
  %s3 = inlined_call_operand.vmem [shape: bf16[512,128], index: 3, kind: input, shape index: {}]
  %s4 = inlined_call_operand.vmem [shape: f32[1,128], index: 4, kind: input, shape index: {}]
  %s5 = inlined_call_operand.vmem [shape: f32[16,128], index: 5, kind: output, shape index: {}]
  %s6 = sld [smem:[#allocation0]]
  $region61: #{_lambda_.1} parent=0
    _
  %s8 = ssub.s32 1, %s6
  %s9 = scalar_select 0, %s8, %s6
  loop: start=0, step=1, limit=4
  $region2: #{_lambda_.1} parent=0 // loop_pre_header
    _
  $region3: #{_lambda_.1} parent=0 // loop_header
    %s11 = sphi 0, %s15
    %p12 = scmp.ge.s32.totalorder %s11, 4
    %s18 = sphi 0, %s30
    %s19 = sphi 0, %s26
    %s20 = sphi 0, %s18
    %s21 = sphi 0, %s19
    %s22 = sphi 0, %s20
    %s23 = sphi 0, %s21
    %s33 = sphi 0, %s35
    %s36 = sphi 0, %s33
    %s37 = sphi 0, %s36
    %s53 = sphi 0, %s37
    %s59 = sphi 0, %s61
    %s62 = sphi 0, %s59
    %s63 = sphi 0, %s62
    %s79 = sphi 0, %s63
    %s85 = sphi 0, %s87
    %s88 = sphi 0, %s85
    %s89 = sphi 0, %s88
    %s105 = sphi 0, %s89
    %s111 = sphi 0, %s113
    %s114 = sphi 0, %s111
    %s115 = sphi 0, %s114
    %s131 = sphi 0, %s115
    %s135 = sphi 0, %s135
    %s137 = sphi 0, %s135
    %s138 = sphi 0, %s137
    %s152 = sphi 0, %s138
    %s158 = sphi 0, %s160
    %s161 = sphi 0, %s158
    %s162 = sphi 0, %s161
    %s178 = sphi 0, %s162
  $region4: #{_lambda_.1} parent=0 // loop_header_branch
    %14 = sbr.rel (%p12) target = $region8
  $region5: #{_lambda_.1} parent=0 // loop_body
    %s16 = ssub.s32 %s11, 1
    %s17 = ssub.s32 %s11, 2
    %s24 = sadd.s32 1, %s19
    %p25 = scmp.ge.s32.totalorder %s24, 1
    %s26 = scalar_select %p25, 0, %s24
    %s27 = sadd.s32 1, %s18
    %s28 = scalar_select %p25, %s27, %s18
    %p29 = scmp.ge.s32.totalorder %s28, 2
    %s30 = scalar_select %p29, 0, %s28
    %s31 = ssub.s32 %s18, %s30
    %p32 = scmp.eq.s32.totalorder %s31, 0
    %s34 = sadd.s32 %s33, 1
    %s35 = scalar_select %p32, %s33, %s34
    %p38 = pneg %p32
    %p39 = scmp.eq.s32.totalorder %s11, 1
    %p40 = por %p38, %p39
    %p41 = scmp.ne.s32.totalorder %s33, %s36
    %p42 = scmp.eq.s32.totalorder %s11, 0
    %p43 = por %p41, %p42
    %p44 = scmp.ne.s32.totalorder %s33, %s36
    %p45 = scmp.eq.s32.totalorder %s16, 1
    %p46 = por %p44, %p45
    %p47 = scmp.ne.s32.totalorder %s36, %s37
    %p48 = scmp.eq.s32.totalorder %s16, 0
    %p49 = por %p47, %p48
    %p50 = scmp.ne.s32.totalorder %s36, %s37
    %p51 = scmp.eq.s32.totalorder %s17, 1
    %p52 = por %p50, %p51
    %p54 = scmp.ne.s32.totalorder %s37, %s53
    %p55 = scmp.eq.s32.totalorder %s17, 0
    %p56 = por %p54, %p55
    %s57 = ssub.s32 %s19, %s26
    %p58 = scmp.eq.s32.totalorder %s57, 0
    %s60 = sadd.s32 %s59, 1
    %s61 = scalar_select %p58, %s59, %s60
    %p64 = pneg %p58
    %p65 = scmp.eq.s32.totalorder %s11, 1
    %p66 = por %p64, %p65
    %p67 = scmp.ne.s32.totalorder %s59, %s62
    %p68 = scmp.eq.s32.totalorder %s11, 0
    %p69 = por %p67, %p68
    %p70 = scmp.ne.s32.totalorder %s59, %s62
    %p71 = scmp.eq.s32.totalorder %s16, 1
    %p72 = por %p70, %p71
    %p73 = scmp.ne.s32.totalorder %s62, %s63
    %p74 = scmp.eq.s32.totalorder %s16, 0
    %p75 = por %p73, %p74
    %p76 = scmp.ne.s32.totalorder %s62, %s63
    %p77 = scmp.eq.s32.totalorder %s17, 1
    %p78 = por %p76, %p77
    %p80 = scmp.ne.s32.totalorder %s63, %s79
    %p81 = scmp.eq.s32.totalorder %s17, 0
    %p82 = por %p80, %p81
    %s83 = ssub.s32 %s19, %s26
    %p84 = scmp.eq.s32.totalorder %s83, 0
    %s86 = sadd.s32 %s85, 1
    %s87 = scalar_select %p84, %s85, %s86
    %p90 = pneg %p84
    %p91 = scmp.eq.s32.totalorder %s11, 1
    %p92 = por %p90, %p91
    %p93 = scmp.ne.s32.totalorder %s85, %s88
    %p94 = scmp.eq.s32.totalorder %s11, 0
    %p95 = por %p93, %p94
    %p96 = scmp.ne.s32.totalorder %s85, %s88
    %p97 = scmp.eq.s32.totalorder %s16, 1
    %p98 = por %p96, %p97
    %p99 = scmp.ne.s32.totalorder %s88, %s89
    %p100 = scmp.eq.s32.totalorder %s16, 0
    %p101 = por %p99, %p100
    %p102 = scmp.ne.s32.totalorder %s88, %s89
    %p103 = scmp.eq.s32.totalorder %s17, 1
    %p104 = por %p102, %p103
    %p106 = scmp.ne.s32.totalorder %s89, %s105
    %p107 = scmp.eq.s32.totalorder %s17, 0
    %p108 = por %p106, %p107
    %s109 = ssub.s32 %s19, %s26
    %p110 = scmp.eq.s32.totalorder %s109, 0
    %s112 = sadd.s32 %s111, 1
    %s113 = scalar_select %p110, %s111, %s112
    %p116 = pneg %p110
    %p117 = scmp.eq.s32.totalorder %s11, 1
    %p118 = por %p116, %p117
    %p119 = scmp.ne.s32.totalorder %s111, %s114
    %p120 = scmp.eq.s32.totalorder %s11, 0
    %p121 = por %p119, %p120
    %p122 = scmp.ne.s32.totalorder %s111, %s114
    %p123 = scmp.eq.s32.totalorder %s16, 1
    %p124 = por %p122, %p123
    %p125 = scmp.ne.s32.totalorder %s114, %s115
    %p126 = scmp.eq.s32.totalorder %s16, 0
    %p127 = por %p125, %p126
    %p128 = scmp.ne.s32.totalorder %s114, %s115
    %p129 = scmp.eq.s32.totalorder %s17, 1
    %p130 = por %p128, %p129
    %p132 = scmp.ne.s32.totalorder %s115, %s131
    %p133 = scmp.eq.s32.totalorder %s17, 0
    %p134 = por %p132, %p133
    %s136 = sadd.s32 %s135, 1
    %p139 = scmp.eq.s32.totalorder %s11, 1
    %p140 = scmp.ne.s32.totalorder %s135, %s137
    %p141 = scmp.eq.s32.totalorder %s11, 0
    %p142 = por %p140, %p141
    %p143 = scmp.ne.s32.totalorder %s135, %s137
    %p144 = scmp.eq.s32.totalorder %s16, 1
    %p145 = por %p143, %p144
    %p146 = scmp.ne.s32.totalorder %s137, %s138
    %p147 = scmp.eq.s32.totalorder %s16, 0
    %p148 = por %p146, %p147
    %p149 = scmp.ne.s32.totalorder %s137, %s138
    %p150 = scmp.eq.s32.totalorder %s17, 1
    %p151 = por %p149, %p150
    %p153 = scmp.ne.s32.totalorder %s138, %s152
    %p154 = scmp.eq.s32.totalorder %s17, 0
    %p155 = por %p153, %p154
    %s156 = ssub.s32 %s18, %s30
    %p157 = scmp.eq.s32.totalorder %s156, 0
    %s159 = sadd.s32 %s158, 1
    %s160 = scalar_select %p157, %s158, %s159
    %p163 = pneg %p157
    %p164 = scmp.eq.s32.totalorder %s11, 1
    %p165 = por %p163, %p164
    %p166 = scmp.ne.s32.totalorder %s158, %s161
    %p167 = scmp.eq.s32.totalorder %s11, 0
    %p168 = por %p166, %p167
    %p169 = scmp.ne.s32.totalorder %s158, %s161
    %p170 = scmp.eq.s32.totalorder %s16, 1
    %p171 = por %p169, %p170
    %p172 = scmp.ne.s32.totalorder %s161, %s162
    %p173 = scmp.eq.s32.totalorder %s16, 0
    %p174 = por %p172, %p173
    %p175 = scmp.ne.s32.totalorder %s161, %s162
    %p176 = scmp.eq.s32.totalorder %s17, 1
    %p177 = por %p175, %p176
    %p179 = scmp.ne.s32.totalorder %s162, %s178
    %p180 = scmp.eq.s32.totalorder %s17, 0
    %p181 = por %p179, %p180
    %p182 = scmp.le.s32.totalorder 1, %s11
    %p183 = scmp.lt.s32.totalorder %s11, 3
    %p184 = pnand %p182, %p183
    %p185 = pneg %p184
    // Predicated region
    $region9: #{_lambda_.1} parent=5 // pred_check
      _
    $region10: #{_lambda_.1} parent=5 // pred_check_branch
      %187 = sbr.rel (%p184) target = $region12
    $region11: #{_lambda_.1} parent=5 // pred_region
      %s188 = ssub.s32 %s11, 1
      // Predicated region
      $region13: #{_lambda_.1} parent=11 // pred_check
        %p189 = pneg %p75
      $region14: #{_lambda_.1} parent=11 // pred_check_branch
        %191 = sbr.rel (%p189) target = $region16
      $region15: #{_lambda_.1} parent=11 // pred_region
        %s192 = smul.u32 4, %s21
        %p193 = scmp.lt.s32.totalorder %s192, 3
        %s194 = scalar_select %p193, %s192, 3
        %s195 = smul.addr %s194, 4
        %s196 = scalar_lea.vmem %s1, %s195
        %s197 = smul.u32 4, %s21
      $region16: #{_lambda_.1} parent=11 // pred_fallthru
        _
      // Predicated region
      $region17: #{_lambda_.1} parent=11 // pred_check
        %p198 = pneg %p101
      $region18: #{_lambda_.1} parent=11 // pred_check_branch
        %200 = sbr.rel (%p198) target = $region20
      $region19: #{_lambda_.1} parent=11 // pred_region
        %s201 = smul.u32 4, %s21
        %p202 = scmp.lt.s32.totalorder %s201, 3
        %s203 = scalar_select %p202, %s201, 3
        %s204 = scalar_lea.vmem %s2, %s203
        %s205 = smul.u32 4, %s21
      $region20: #{_lambda_.1} parent=11 // pred_fallthru
        _
      // Predicated region
      $region21: #{_lambda_.1} parent=11 // pred_check
        %p206 = pneg %p127
      $region22: #{_lambda_.1} parent=11 // pred_check_branch
        %208 = sbr.rel (%p206) target = $region24
      $region23: #{_lambda_.1} parent=11 // pred_region
        %s209 = smul.u32 64, %s21
        %p210 = scmp.lt.s32.totalorder %s209, 63
        %s211 = scalar_select %p210, %s209, 63
        %s212 = smul.addr %s211, 4
        %s213 = scalar_lea.vmem %s3, %s212
        %s214 = smul.u32 64, %s21
      $region24: #{_lambda_.1} parent=11 // pred_fallthru
        _
      // Predicated region
      $region25: #{_lambda_.1} parent=11 // pred_check
        %p215 = pneg %p148
      $region26: #{_lambda_.1} parent=11 // pred_check_branch
        %217 = sbr.rel (%p215) target = $region28
      $region27: #{_lambda_.1} parent=11 // pred_region
        _
      $region28: #{_lambda_.1} parent=11 // pred_fallthru
        _
    $region12: #{_lambda_.1} parent=5 // pred_fallthru
      _
    %p218 = scmp.lt.s32.totalorder %s11, 2
    // Predicated region
    $region29: #{_lambda_.1} parent=5 // pred_check
      %p219 = pneg %p218
    $region30: #{_lambda_.1} parent=5 // pred_check_branch
      %221 = sbr.rel (%p219) target = $region32
    $region31: #{_lambda_.1} parent=5 // pred_region
      // Predicated region
      $region33: #{_lambda_.1} parent=31 // pred_check
        %p222 = pneg %p43
      $region34: #{_lambda_.1} parent=31 // pred_check_branch
        %224 = sbr.rel (%p222) target = $region36
      $region35: #{_lambda_.1} parent=31 // pred_region
        %p225 = scmp.lt.s32.totalorder %s18, 1
        %s226 = scalar_select %p225, %s18, 1
        %s227 = smul.addr %s226, 4
        %s228 = scalar_lea.vmem %s0, %s227
      $region36: #{_lambda_.1} parent=31 // pred_fallthru
        _
    $region32: #{_lambda_.1} parent=5 // pred_fallthru
      _
    %p229 = scmp.le.s32.totalorder 1, %s11
    %p230 = scmp.lt.s32.totalorder %s11, 3
    %p231 = pnand %p229, %p230
    %p232 = pneg %p231
    // Predicated region
    $region37: #{_lambda_.1} parent=5 // pred_check
      _
    $region38: #{_lambda_.1} parent=5 // pred_check_branch
      %234 = sbr.rel (%p231) target = $region40
    $region39: #{_lambda_.1} parent=5 // pred_region
      %s235 = ssub.s32 %s11, 1
      %p236 = scmp.lt.s32.totalorder %s20, 1
      %s237 = scalar_select %p236, %s20, 1
      %s238 = smul.addr %s237, 4
      %s239 = scalar_lea.vmem %s0, %s238
      %p240 = pneg %p49
      %p241 = pneg %p46
      %s242 = smul.u32 4, %s21
      %p243 = scmp.lt.s32.totalorder %s242, 3
      %s244 = scalar_select %p243, %s242, 3
      %s245 = smul.addr %s244, 4
      %s246 = scalar_lea.vmem %s1, %s245
      %p247 = pneg %p75
      %p248 = pneg %p72
      %s249 = smul.u32 4, %s21
      %p250 = scmp.lt.s32.totalorder %s249, 3
      %s251 = scalar_select %p250, %s249, 3
      %s252 = scalar_lea.vmem %s2, %s251
      %p253 = pneg %p101
      %p254 = pneg %p98
      %s255 = smul.u32 64, %s21
      %p256 = scmp.lt.s32.totalorder %s255, 63
      %s257 = scalar_select %p256, %s255, 63
      %s258 = smul.addr %s257, 4
      %s259 = scalar_lea.vmem %s3, %s258
      %p260 = pneg %p127
      %p261 = pneg %p124
      %p262 = pneg %p148
      %p263 = pneg %p145
      %p264 = pneg %p174
      %p265 = pneg %p171
      %p266 = scmp.lt.s32.totalorder %s20, 1
      %s267 = scalar_select %p266, %s20, 1
      %s268 = smul.addr %s267, 8
      %s269 = scalar_lea.vmem %s5, %s268
      %p270 = scmp.lt.s32.totalorder %s20, 1
      %s271 = scalar_select %p270, %s20, 1
      %s272 = smul.addr %s271, 4
      %s273 = scalar_lea.vmem %s0, %s272
      %s274 = smul.u32 4, %s21
      %p275 = scmp.lt.s32.totalorder %s274, 3
      %s276 = scalar_select %p275, %s274, 3
      %s277 = smul.addr %s276, 4
      %s278 = scalar_lea.vmem %s1, %s277
      %s279 = smul.u32 4, %s21
      %s280 = smul.u32 4, %s21
      %p281 = scmp.lt.s32.totalorder %s280, 3
      %s282 = scalar_select %p281, %s280, 3
      %s283 = scalar_lea.vmem %s2, %s282
      %s284 = smul.u32 4, %s21
      %s285 = smul.u32 64, %s21
      %p286 = scmp.lt.s32.totalorder %s285, 63
      %s287 = scalar_select %p286, %s285, 63
      %s288 = smul.addr %s287, 4
      %s289 = scalar_lea.vmem %s3, %s288
      %s290 = smul.u32 64, %s21
      %p291 = scmp.lt.s32.totalorder %s20, 1
      %s292 = scalar_select %p291, %s20, 1
      %s293 = smul.addr %s292, 8
      %s294 = scalar_lea.vmem %s5, %s293
      %p296 = scmp.eq.s32.totalorder %s21, 0
      // Predicated region
      $region41: #{_lambda_.1} parent=39 // pred_check
        %p297 = pneg %p296
      $region42: #{_lambda_.1} parent=39 // pred_check_branch
        %299 = sbr.rel (%p297) target = $region44
      $region43: #{_lambda_.1} parent=39 // pred_region
        %300 = vst [vmem:[#allocation2] sm:$0xff] 0.0
      $region44: #{_lambda_.1} parent=39 // pred_fallthru
        _
      %v301 = vld [vmem:[%s273] sm:$0xf]
      %v302 = vld [vmem:[%s278] sm:$0xff]
      %v303 = vld [vmem:[%s278 + $0x8] sm:$0xff]
      %v304 = vld [vmem:[%s278 + $0x10] sm:$0xff]
      %v305 = vld [vmem:[%s278 + $0x18] sm:$0xff]
      %v306 = vld [vmem:[%s278 + $0x20] sm:$0xff]
      %v307 = vld [vmem:[%s278 + $0x28] sm:$0xff]
      %v308 = vld [vmem:[%s278 + $0x30] sm:$0xff]
      %v309 = vld [vmem:[%s278 + $0x38] sm:$0xff]
      %v310 = vld [vmem:[%s278 + $0x40] sm:$0xff]
      %v311 = vld [vmem:[%s278 + $0x48] sm:$0xff]
      %v312 = vld [vmem:[%s278 + $0x50] sm:$0xff]
      %v313 = vld [vmem:[%s278 + $0x58] sm:$0xff]
      %v314 = vld [vmem:[%s278 + $0x60] sm:$0xff]
      %v315 = vld [vmem:[%s278 + $0x68] sm:$0xff]
      %v316 = vld [vmem:[%s278 + $0x70] sm:$0xff]
      %v317 = vld [vmem:[%s278 + $0x78] sm:$0xff]
      %v318 = vld [vmem:[%s278 + $0x80] sm:$0xff]
      %v319 = vld [vmem:[%s278 + $0x88] sm:$0xff]
      %v320 = vld [vmem:[%s278 + $0x90] sm:$0xff]
      %v321 = vld [vmem:[%s278 + $0x98] sm:$0xff]
      %v322 = vld [vmem:[%s278 + $0xa0] sm:$0xff]
      %v323 = vld [vmem:[%s278 + $0xa8] sm:$0xff]
      %v324 = vld [vmem:[%s278 + $0xb0] sm:$0xff]
      %v325 = vld [vmem:[%s278 + $0xb8] sm:$0xff]
      %v326 = vld [vmem:[%s278 + $0xc0] sm:$0xff]
      %v327 = vld [vmem:[%s278 + $0xc8] sm:$0xff]
      %v328 = vld [vmem:[%s278 + $0xd0] sm:$0xff]
      %v329 = vld [vmem:[%s278 + $0xd8] sm:$0xff]
      %v330 = vld [vmem:[%s278 + $0xe0] sm:$0xff]
      %v331 = vld [vmem:[%s278 + $0xe8] sm:$0xff]
      %v332 = vld [vmem:[%s278 + $0xf0] sm:$0xff]
      %v333 = vld [vmem:[%s278 + $0xf8] sm:$0xff]
      %v334 = vld [vmem:[%s283] sm:$0xf]
      %v336 = vlaneseq
      %v337 = vshrl.u32 %v336, 7
      %v338 = vsub.s32 0, %v337
      %v339 = vrot.slane %v334, %v338
      %v340 = vlaneseq
      %v341 = vshrl.u32 %v340, 7
      %v342 = vsub.s32 1, %v341
      %v343 = vrot.slane %v334, %v342
      %v344 = vlaneseq
      %v345 = vshrl.u32 %v344, 7
      %v346 = vsub.s32 2, %v345
      %v347 = vrot.slane %v334, %v346
      %v348 = vlaneseq
      %v349 = vshrl.u32 %v348, 7
      %v350 = vsub.s32 3, %v349
      %v351 = vrot.slane %v334, %v350
      %v388 = vunpack.c.l.b16 %v302
      %v389 = vunpack.c.h.b16 %v302
      %v390 = vunpack.c.l.b16 %v303
      %v391 = vunpack.c.h.b16 %v303
      %v392 = vunpack.c.l.b16 %v304
      %v393 = vunpack.c.h.b16 %v304
      %v394 = vunpack.c.l.b16 %v305
      %v395 = vunpack.c.h.b16 %v305
      %v396 = vunpack.c.l.b16 %v306
      %v397 = vunpack.c.h.b16 %v306
      %v398 = vunpack.c.l.b16 %v307
      %v399 = vunpack.c.h.b16 %v307
      %v400 = vunpack.c.l.b16 %v308
      %v401 = vunpack.c.h.b16 %v308
      %v402 = vunpack.c.l.b16 %v309
      %v403 = vunpack.c.h.b16 %v309
      %v404 = vunpack.c.l.b16 %v310
      %v405 = vunpack.c.h.b16 %v310
      %v406 = vunpack.c.l.b16 %v311
      %v407 = vunpack.c.h.b16 %v311
      %v408 = vunpack.c.l.b16 %v312
      %v409 = vunpack.c.h.b16 %v312
      %v410 = vunpack.c.l.b16 %v313
      %v411 = vunpack.c.h.b16 %v313
      %v412 = vunpack.c.l.b16 %v314
      %v413 = vunpack.c.h.b16 %v314
      %v414 = vunpack.c.l.b16 %v315
      %v415 = vunpack.c.h.b16 %v315
      %v416 = vunpack.c.l.b16 %v316
      %v417 = vunpack.c.h.b16 %v316
      %v418 = vunpack.c.l.b16 %v317
      %v419 = vunpack.c.h.b16 %v317
      %v420 = vunpack.c.l.b16 %v318
      %v421 = vunpack.c.h.b16 %v318
      %v422 = vunpack.c.l.b16 %v319
      %v423 = vunpack.c.h.b16 %v319
      %v424 = vunpack.c.l.b16 %v320
      %v425 = vunpack.c.h.b16 %v320
      %v426 = vunpack.c.l.b16 %v321
      %v427 = vunpack.c.h.b16 %v321
      %v428 = vunpack.c.l.b16 %v322
      %v429 = vunpack.c.h.b16 %v322
      %v430 = vunpack.c.l.b16 %v323
      %v431 = vunpack.c.h.b16 %v323
      %v432 = vunpack.c.l.b16 %v324
      %v433 = vunpack.c.h.b16 %v324
      %v434 = vunpack.c.l.b16 %v325
      %v435 = vunpack.c.h.b16 %v325
      %v436 = vunpack.c.l.b16 %v326
      %v437 = vunpack.c.h.b16 %v326
      %v438 = vunpack.c.l.b16 %v327
      %v439 = vunpack.c.h.b16 %v327
      %v440 = vunpack.c.l.b16 %v328
      %v441 = vunpack.c.h.b16 %v328
      %v442 = vunpack.c.l.b16 %v329
      %v443 = vunpack.c.h.b16 %v329
      %v444 = vunpack.c.l.b16 %v330
      %v445 = vunpack.c.h.b16 %v330
      %v446 = vunpack.c.l.b16 %v331
      %v447 = vunpack.c.h.b16 %v331
      %v448 = vunpack.c.l.b16 %v332
      %v449 = vunpack.c.h.b16 %v332
      %v450 = vunpack.c.l.b16 %v333
      %v451 = vunpack.c.h.b16 %v333
      %v452 = vpack.c.b16 %v392, %v388
      %v453 = vpack.c.b16 %v393, %v389
      %v454 = vpack.c.b16 %v394, %v390
      %v455 = vpack.c.b16 %v395, %v391
      %v456 = vpack.c.b16 %v400, %v396
      %v457 = vpack.c.b16 %v401, %v397
      %v458 = vpack.c.b16 %v402, %v398
      %v459 = vpack.c.b16 %v403, %v399
      %v460 = vpack.c.b16 %v408, %v404
      %v461 = vpack.c.b16 %v409, %v405
      %v462 = vpack.c.b16 %v410, %v406
      %v463 = vpack.c.b16 %v411, %v407
      %v464 = vpack.c.b16 %v416, %v412
      %v465 = vpack.c.b16 %v417, %v413
      %v466 = vpack.c.b16 %v418, %v414
      %v467 = vpack.c.b16 %v419, %v415
      %v468 = vpack.c.b16 %v424, %v420
      %v469 = vpack.c.b16 %v425, %v421
      %v470 = vpack.c.b16 %v426, %v422
      %v471 = vpack.c.b16 %v427, %v423
      %v472 = vpack.c.b16 %v432, %v428
      %v473 = vpack.c.b16 %v433, %v429
      %v474 = vpack.c.b16 %v434, %v430
      %v475 = vpack.c.b16 %v435, %v431
      %v476 = vpack.c.b16 %v440, %v436
      %v477 = vpack.c.b16 %v441, %v437
      %v478 = vpack.c.b16 %v442, %v438
      %v479 = vpack.c.b16 %v443, %v439
      %v480 = vpack.c.b16 %v448, %v444
      %v481 = vpack.c.b16 %v449, %v445
      %v482 = vpack.c.b16 %v450, %v446
      %v483 = vpack.c.b16 %v451, %v447
      %516 = vmatprep.subr.bf16.mxu0 %v453
      %517 = vmatpush1.bf16.msra.mxu0 %v452
      %518 = vmatprep.subr.bf16.mxu0 %v457
      %519 = vmatpush1.bf16.msra.mxu0 %v456
      %520 = vmatprep.subr.bf16.mxu0 %v461
      %521 = vmatpush1.bf16.msra.mxu0 %v460
      %522 = vmatprep.subr.bf16.mxu0 %v465
      %523 = vmatpush1.bf16.msra.mxu0 %v464
      %524 = vmatprep.subr.bf16.mxu0 %v469
      %525 = vmatpush1.bf16.msra.mxu0 %v468
      %526 = vmatprep.subr.bf16.mxu0 %v473
      %527 = vmatpush1.bf16.msra.mxu0 %v472
      %528 = vmatprep.subr.bf16.mxu0 %v477
      %529 = vmatpush1.bf16.msra.mxu0 %v476
      %530 = vmatprep.subr.bf16.mxu0 %v481
      %531 = vmatpush1.bf16.msra.mxu0 %v480
      %532 = vmatprep.subr.bf16.mxu0 0
      %533 = vmatpush1.bf16.msra.mxu0 0
      %534 = vmatprep.subr.bf16.mxu0 0
      %535 = vmatpush1.bf16.msra.mxu0 0
      %536 = vmatprep.subr.bf16.mxu0 0
      %537 = vmatpush1.bf16.msra.mxu0 0
      %538 = vmatprep.subr.bf16.mxu0 0
      %539 = vmatpush1.bf16.msra.mxu0 0
      %540 = vmatprep.subr.bf16.mxu0 0
      %541 = vmatpush1.bf16.msra.mxu0 0
      %542 = vmatprep.subr.bf16.mxu0 0
      %543 = vmatpush1.bf16.msra.mxu0 0
      %544 = vmatprep.subr.bf16.mxu0 0
      %545 = vmatpush1.bf16.msra.mxu0 0
      %546 = vmatprep.subr.bf16.mxu0 0
      %547 = vmatpush1.bf16.msra.mxu0 0
      %548 = vmatprep.mubr.bf16.mxu0 0
      %549 = vmatmul.mubr.bf16.gmra.mrb[0].mxu0 %v301
      %v550 = vpop.f32.mrb[0].mxu0
      %v551 = vadd.f32 %v339, %v550
      %v552 = vpop.f32.mrb[0].mxu0
      %v553 = vadd.f32 %v343, %v552
      %v554 = vpop.f32.mrb[0].mxu0
      %v555 = vpop.f32.mrb[0].mxu0
      %556 = vdwg.mxu0
      %557 = vmatprep.subr.bf16.mxu0 %v455
      %558 = vmatpush1.bf16.msra.mxu0 %v454
      %559 = vmatprep.subr.bf16.mxu0 %v459
      %560 = vmatpush1.bf16.msra.mxu0 %v458
      %561 = vmatprep.subr.bf16.mxu0 %v463
      %562 = vmatpush1.bf16.msra.mxu0 %v462
      %563 = vmatprep.subr.bf16.mxu0 %v467
      %564 = vmatpush1.bf16.msra.mxu0 %v466
      %565 = vmatprep.subr.bf16.mxu0 %v471
      %566 = vmatpush1.bf16.msra.mxu0 %v470
      %567 = vmatprep.subr.bf16.mxu0 %v475
      %568 = vmatpush1.bf16.msra.mxu0 %v474
      %569 = vmatprep.subr.bf16.mxu0 %v479
      %570 = vmatpush1.bf16.msra.mxu0 %v478
      %571 = vmatprep.subr.bf16.mxu0 %v483
      %572 = vmatpush1.bf16.msra.mxu0 %v482
      %573 = vmatprep.subr.bf16.mxu0 0
      %574 = vmatpush1.bf16.msra.mxu0 0
      %575 = vmatprep.subr.bf16.mxu0 0
      %576 = vmatpush1.bf16.msra.mxu0 0
      %577 = vmatprep.subr.bf16.mxu0 0
      %578 = vmatpush1.bf16.msra.mxu0 0
      %579 = vmatprep.subr.bf16.mxu0 0
      %580 = vmatpush1.bf16.msra.mxu0 0
      %581 = vmatprep.subr.bf16.mxu0 0
      %582 = vmatpush1.bf16.msra.mxu0 0
      %583 = vmatprep.subr.bf16.mxu0 0
      %584 = vmatpush1.bf16.msra.mxu0 0
      %585 = vmatprep.subr.bf16.mxu0 0
      %586 = vmatpush1.bf16.msra.mxu0 0
      %587 = vmatprep.subr.bf16.mxu0 0
      %588 = vmatpush1.bf16.msra.mxu0 0
      %589 = vmatprep.mubr.bf16.mxu0 0
      %590 = vmatmul.mubr.bf16.gmra.mrb[0].mxu0 %v301
      %v591 = vpop.f32.mrb[0].mxu0
      %v592 = vadd.f32 %v347, %v591
      %v593 = vpop.f32.mrb[0].mxu0
      %v594 = vadd.f32 %v351, %v593
      %v595 = vpop.f32.mrb[0].mxu0
      %v596 = vpop.f32.mrb[0].mxu0
      %597 = vdwg.mxu0
      %v598 = vmax.f32 %v551, 0.0
      %v599 = vmax.f32 %v553, 0.0
      %v600 = vmax.f32 %v592, 0.0
      %v601 = vmax.f32 %v594, 0.0
      %v602 = vld [vmem:[#allocation2] sm:$0xff]
      %v603 = vpack.c.bf16 %v598, %v598
      %v604 = vpack.c.bf16 %v599, %v599
      %v605 = vpack.c.bf16 %v600, %v600
      %v606 = vpack.c.bf16 %v601, %v601
      %v607 = vld [vmem:[%s289] sm:$0xf]
      %v608 = vld [vmem:[%s289 + $0x4] sm:$0xf]
      %v609 = vld [vmem:[%s289 + $0x8] sm:$0xf]
      %v610 = vld [vmem:[%s289 + $0xc] sm:$0xf]
      %v611 = vld [vmem:[%s289 + $0x10] sm:$0xf]
      %v612 = vld [vmem:[%s289 + $0x14] sm:$0xf]
      %v613 = vld [vmem:[%s289 + $0x18] sm:$0xf]
      %v614 = vld [vmem:[%s289 + $0x1c] sm:$0xf]
      %v615 = vld [vmem:[%s289 + $0x20] sm:$0xf]
      %v616 = vld [vmem:[%s289 + $0x24] sm:$0xf]
      %v617 = vld [vmem:[%s289 + $0x28] sm:$0xf]
      %v618 = vld [vmem:[%s289 + $0x2c] sm:$0xf]
      %v619 = vld [vmem:[%s289 + $0x30] sm:$0xf]
      %v620 = vld [vmem:[%s289 + $0x34] sm:$0xf]
      %v621 = vld [vmem:[%s289 + $0x38] sm:$0xf]
      %v622 = vld [vmem:[%s289 + $0x3c] sm:$0xf]
      %v623 = vld [vmem:[%s289 + $0x40] sm:$0xf]
      %v624 = vld [vmem:[%s289 + $0x44] sm:$0xf]
      %v625 = vld [vmem:[%s289 + $0x48] sm:$0xf]
      %v626 = vld [vmem:[%s289 + $0x4c] sm:$0xf]
      %v627 = vld [vmem:[%s289 + $0x50] sm:$0xf]
      %v628 = vld [vmem:[%s289 + $0x54] sm:$0xf]
      %v629 = vld [vmem:[%s289 + $0x58] sm:$0xf]
      %v630 = vld [vmem:[%s289 + $0x5c] sm:$0xf]
      %v631 = vld [vmem:[%s289 + $0x60] sm:$0xf]
      %v632 = vld [vmem:[%s289 + $0x64] sm:$0xf]
      %v633 = vld [vmem:[%s289 + $0x68] sm:$0xf]
      %v634 = vld [vmem:[%s289 + $0x6c] sm:$0xf]
      %v635 = vld [vmem:[%s289 + $0x70] sm:$0xf]
      %v636 = vld [vmem:[%s289 + $0x74] sm:$0xf]
      %v637 = vld [vmem:[%s289 + $0x78] sm:$0xf]
      %v638 = vld [vmem:[%s289 + $0x7c] sm:$0xf]
      %v639 = vld [vmem:[%s289 + $0x80] sm:$0xf]
      %v640 = vld [vmem:[%s289 + $0x84] sm:$0xf]
      %v641 = vld [vmem:[%s289 + $0x88] sm:$0xf]
      %v642 = vld [vmem:[%s289 + $0x8c] sm:$0xf]
      %v643 = vld [vmem:[%s289 + $0x90] sm:$0xf]
      %v644 = vld [vmem:[%s289 + $0x94] sm:$0xf]
      %v645 = vld [vmem:[%s289 + $0x98] sm:$0xf]
      %v646 = vld [vmem:[%s289 + $0x9c] sm:$0xf]
      %v647 = vld [vmem:[%s289 + $0xa0] sm:$0xf]
      %v648 = vld [vmem:[%s289 + $0xa4] sm:$0xf]
      %v649 = vld [vmem:[%s289 + $0xa8] sm:$0xf]
      %v650 = vld [vmem:[%s289 + $0xac] sm:$0xf]
      %v651 = vld [vmem:[%s289 + $0xb0] sm:$0xf]
      %v652 = vld [vmem:[%s289 + $0xb4] sm:$0xf]
      %v653 = vld [vmem:[%s289 + $0xb8] sm:$0xf]
      %v654 = vld [vmem:[%s289 + $0xbc] sm:$0xf]
      %v655 = vld [vmem:[%s289 + $0xc0] sm:$0xf]
      %v656 = vld [vmem:[%s289 + $0xc4] sm:$0xf]
      %v657 = vld [vmem:[%s289 + $0xc8] sm:$0xf]
      %v658 = vld [vmem:[%s289 + $0xcc] sm:$0xf]
      %v659 = vld [vmem:[%s289 + $0xd0] sm:$0xf]
      %v660 = vld [vmem:[%s289 + $0xd4] sm:$0xf]
      %v661 = vld [vmem:[%s289 + $0xd8] sm:$0xf]
      %v662 = vld [vmem:[%s289 + $0xdc] sm:$0xf]
      %v663 = vld [vmem:[%s289 + $0xe0] sm:$0xf]
      %v664 = vld [vmem:[%s289 + $0xe4] sm:$0xf]
      %v665 = vld [vmem:[%s289 + $0xe8] sm:$0xf]
      %v666 = vld [vmem:[%s289 + $0xec] sm:$0xf]
      %v667 = vld [vmem:[%s289 + $0xf0] sm:$0xf]
      %v668 = vld [vmem:[%s289 + $0xf4] sm:$0xf]
      %v669 = vld [vmem:[%s289 + $0xf8] sm:$0xf]
      %v670 = vld [vmem:[%s289 + $0xfc] sm:$0xf]
      %v735 = vunpack.c.l.b16 %v607
      %v736 = vunpack.c.l.b16 %v608
      %v737 = vunpack.c.l.b16 %v609
      %v738 = vunpack.c.l.b16 %v610
      %v739 = vunpack.c.l.b16 %v611
      %v740 = vunpack.c.l.b16 %v612
      %v741 = vunpack.c.l.b16 %v613
      %v742 = vunpack.c.l.b16 %v614
      %v743 = vunpack.c.l.b16 %v615
      %v744 = vunpack.c.l.b16 %v616
      %v745 = vunpack.c.l.b16 %v617
      %v746 = vunpack.c.l.b16 %v618
      %v747 = vunpack.c.l.b16 %v619
      %v748 = vunpack.c.l.b16 %v620
      %v749 = vunpack.c.l.b16 %v621
      %v750 = vunpack.c.l.b16 %v622
      %v751 = vunpack.c.l.b16 %v623
      %v752 = vunpack.c.l.b16 %v624
      %v753 = vunpack.c.l.b16 %v625
      %v754 = vunpack.c.l.b16 %v626
      %v755 = vunpack.c.l.b16 %v627
      %v756 = vunpack.c.l.b16 %v628
      %v757 = vunpack.c.l.b16 %v629
      %v758 = vunpack.c.l.b16 %v630
      %v759 = vunpack.c.l.b16 %v631
      %v760 = vunpack.c.l.b16 %v632
      %v761 = vunpack.c.l.b16 %v633
      %v762 = vunpack.c.l.b16 %v634
      %v763 = vunpack.c.l.b16 %v635
      %v764 = vunpack.c.l.b16 %v636
      %v765 = vunpack.c.l.b16 %v637
      %v766 = vunpack.c.l.b16 %v638
      %v767 = vunpack.c.l.b16 %v639
      %v768 = vunpack.c.l.b16 %v640
      %v769 = vunpack.c.l.b16 %v641
      %v770 = vunpack.c.l.b16 %v642
      %v771 = vunpack.c.l.b16 %v643
      %v772 = vunpack.c.l.b16 %v644
      %v773 = vunpack.c.l.b16 %v645
      %v774 = vunpack.c.l.b16 %v646
      %v775 = vunpack.c.l.b16 %v647
      %v776 = vunpack.c.l.b16 %v648
      %v777 = vunpack.c.l.b16 %v649
      %v778 = vunpack.c.l.b16 %v650
      %v779 = vunpack.c.l.b16 %v651
      %v780 = vunpack.c.l.b16 %v652
      %v781 = vunpack.c.l.b16 %v653
      %v782 = vunpack.c.l.b16 %v654
      %v783 = vunpack.c.l.b16 %v655
      %v784 = vunpack.c.l.b16 %v656
      %v785 = vunpack.c.l.b16 %v657
      %v786 = vunpack.c.l.b16 %v658
      %v787 = vunpack.c.l.b16 %v659
      %v788 = vunpack.c.l.b16 %v660
      %v789 = vunpack.c.l.b16 %v661
      %v790 = vunpack.c.l.b16 %v662
      %v791 = vunpack.c.l.b16 %v663
      %v792 = vunpack.c.l.b16 %v664
      %v793 = vunpack.c.l.b16 %v665
      %v794 = vunpack.c.l.b16 %v666
      %v795 = vunpack.c.l.b16 %v667
      %v796 = vunpack.c.l.b16 %v668
      %v797 = vunpack.c.l.b16 %v669
      %v798 = vunpack.c.l.b16 %v670
      %v799 = vpack.c.b16 %v736, %v735
      %v800 = vpack.c.b16 %v738, %v737
      %v801 = vpack.c.b16 %v740, %v739
      %v802 = vpack.c.b16 %v742, %v741
      %v803 = vpack.c.b16 %v744, %v743
      %v804 = vpack.c.b16 %v746, %v745
      %v805 = vpack.c.b16 %v748, %v747
      %v806 = vpack.c.b16 %v750, %v749
      %v807 = vpack.c.b16 %v752, %v751
      %v808 = vpack.c.b16 %v754, %v753
      %v809 = vpack.c.b16 %v756, %v755
      %v810 = vpack.c.b16 %v758, %v757
      %v811 = vpack.c.b16 %v760, %v759
      %v812 = vpack.c.b16 %v762, %v761
      %v813 = vpack.c.b16 %v764, %v763
      %v814 = vpack.c.b16 %v766, %v765
      %v815 = vpack.c.b16 %v768, %v767
      %v816 = vpack.c.b16 %v770, %v769
      %v817 = vpack.c.b16 %v772, %v771
      %v818 = vpack.c.b16 %v774, %v773
      %v819 = vpack.c.b16 %v776, %v775
      %v820 = vpack.c.b16 %v778, %v777
      %v821 = vpack.c.b16 %v780, %v779
      %v822 = vpack.c.b16 %v782, %v781
      %v823 = vpack.c.b16 %v784, %v783
      %v824 = vpack.c.b16 %v786, %v785
      %v825 = vpack.c.b16 %v788, %v787
      %v826 = vpack.c.b16 %v790, %v789
      %v827 = vpack.c.b16 %v792, %v791
      %v828 = vpack.c.b16 %v794, %v793
      %v829 = vpack.c.b16 %v796, %v795
      %v830 = vpack.c.b16 %v798, %v797
      %863 = vmatprep.subr.bf16.mxu0 0
      %864 = vmatpush1.bf16.msra.mxu0 %v799
      %865 = vmatprep.subr.bf16.mxu0 0
      %866 = vmatpush1.bf16.msra.mxu0 %v800
      %867 = vmatprep.subr.bf16.mxu0 0
      %868 = vmatpush1.bf16.msra.mxu0 %v801
      %869 = vmatprep.subr.bf16.mxu0 0
      %870 = vmatpush1.bf16.msra.mxu0 %v802
      %871 = vmatprep.subr.bf16.mxu0 0
      %872 = vmatpush1.bf16.msra.mxu0 %v803
      %873 = vmatprep.subr.bf16.mxu0 0
      %874 = vmatpush1.bf16.msra.mxu0 %v804
      %875 = vmatprep.subr.bf16.mxu0 0
      %876 = vmatpush1.bf16.msra.mxu0 %v805
      %877 = vmatprep.subr.bf16.mxu0 0
      %878 = vmatpush1.bf16.msra.mxu0 %v806
      %879 = vmatprep.subr.bf16.mxu0 0
      %880 = vmatpush1.bf16.msra.mxu0 %v807
      %881 = vmatprep.subr.bf16.mxu0 0
      %882 = vmatpush1.bf16.msra.mxu0 %v808
      %883 = vmatprep.subr.bf16.mxu0 0
      %884 = vmatpush1.bf16.msra.mxu0 %v809
      %885 = vmatprep.subr.bf16.mxu0 0
      %886 = vmatpush1.bf16.msra.mxu0 %v810
      %887 = vmatprep.subr.bf16.mxu0 0
      %888 = vmatpush1.bf16.msra.mxu0 %v811
      %889 = vmatprep.subr.bf16.mxu0 0
      %890 = vmatpush1.bf16.msra.mxu0 %v812
      %891 = vmatprep.subr.bf16.mxu0 0
      %892 = vmatpush1.bf16.msra.mxu0 %v813
      %893 = vmatprep.subr.bf16.mxu0 0
      %894 = vmatpush1.bf16.msra.mxu0 %v814
      %895 = vmatprep.mubr.bf16.mxu0 %v604
      %896 = vmatmul.mubr.bf16.gmra.mrb[0].mxu0 %v603
      %v897 = vpop.f32.mrb[0].mxu0
      %v898 = vadd.f32 0.0, %v897
      %v899 = vpop.f32.mrb[0].mxu0
      %v900 = vpop.f32.mrb[0].mxu0
      %v901 = vpop.f32.mrb[0].mxu0
      %902 = vdwg.mxu0
      %903 = vmatprep.subr.bf16.mxu0 0
      %904 = vmatpush1.bf16.msra.mxu0 %v815
      %905 = vmatprep.subr.bf16.mxu0 0
      %906 = vmatpush1.bf16.msra.mxu0 %v816
      %907 = vmatprep.subr.bf16.mxu0 0
      %908 = vmatpush1.bf16.msra.mxu0 %v817
      %909 = vmatprep.subr.bf16.mxu0 0
      %910 = vmatpush1.bf16.msra.mxu0 %v818
      %911 = vmatprep.subr.bf16.mxu0 0
      %912 = vmatpush1.bf16.msra.mxu0 %v819
      %913 = vmatprep.subr.bf16.mxu0 0
      %914 = vmatpush1.bf16.msra.mxu0 %v820
      %915 = vmatprep.subr.bf16.mxu0 0
      %916 = vmatpush1.bf16.msra.mxu0 %v821
      %917 = vmatprep.subr.bf16.mxu0 0
      %918 = vmatpush1.bf16.msra.mxu0 %v822
      %919 = vmatprep.subr.bf16.mxu0 0
      %920 = vmatpush1.bf16.msra.mxu0 %v823
      %921 = vmatprep.subr.bf16.mxu0 0
      %922 = vmatpush1.bf16.msra.mxu0 %v824
      %923 = vmatprep.subr.bf16.mxu0 0
      %924 = vmatpush1.bf16.msra.mxu0 %v825
      %925 = vmatprep.subr.bf16.mxu0 0
      %926 = vmatpush1.bf16.msra.mxu0 %v826
      %927 = vmatprep.subr.bf16.mxu0 0
      %928 = vmatpush1.bf16.msra.mxu0 %v827
      %929 = vmatprep.subr.bf16.mxu0 0
      %930 = vmatpush1.bf16.msra.mxu0 %v828
      %931 = vmatprep.subr.bf16.mxu0 0
      %932 = vmatpush1.bf16.msra.mxu0 %v829
      %933 = vmatprep.subr.bf16.mxu0 0
      %934 = vmatpush1.bf16.msra.mxu0 %v830
      %935 = vmatprep.mubr.bf16.mxu0 %v606
      %936 = vmatmul.mubr.bf16.gmra.mrb[0].mxu0 %v605
      %v937 = vpop.f32.mrb[0].mxu0
      %v938 = vadd.f32 %v898, %v937
      %v939 = vpop.f32.mrb[0].mxu0
      %v940 = vpop.f32.mrb[0].mxu0
      %v941 = vpop.f32.mrb[0].mxu0
      %942 = vdwg.mxu0
      %v943 = vadd.f32 %v602, %v938
      %944 = vst [vmem:[#allocation2] sm:$0xff] %v943
      // Predicated region
      $region45: #{_lambda_.1} parent=39 // pred_check
        %p945 = pneg %p296
      $region46: #{_lambda_.1} parent=39 // pred_check_branch
        %947 = sbr.rel (%p945) target = $region48
      $region47: #{_lambda_.1} parent=39 // pred_region
        %v948 = vld [vmem:[#allocation2] sm:$0xff]
        %v949 = vld [vmem:[%s4] sm:$0x1]
        %v951 = vlaneseq
        %v952 = vshrl.u32 %v951, 7
        %v953 = vsub.s32 0, %v952
        %v954 = vrot.slane %v949, %v953
        %v956 = vadd.f32 %v948, %v954
        %957 = vst [vmem:[%s294] sm:$0xff] %v956
      $region48: #{_lambda_.1} parent=39 // pred_fallthru
        _
      %p958 = scmp.lt.s32.totalorder %s20, 1
      %s959 = scalar_select %p958, %s20, 1
      %s960 = smul.addr %s959, 8
      %s961 = scalar_lea.vmem %s5, %s960
      // Predicated region
      $region49: #{_lambda_.1} parent=39 // pred_check
        %p962 = pneg %p171
      $region50: #{_lambda_.1} parent=39 // pred_check_branch
        %964 = sbr.rel (%p962) target = $region52
      $region51: #{_lambda_.1} parent=39 // pred_region
        _
      $region52: #{_lambda_.1} parent=39 // pred_fallthru
        _
    $region40: #{_lambda_.1} parent=5 // pred_fallthru
      _
    %p965 = scmp.le.s32.totalorder 2, %s11
    // Predicated region
    $region53: #{_lambda_.1} parent=5 // pred_check
      %p966 = pneg %p965
    $region54: #{_lambda_.1} parent=5 // pred_check_branch
      %968 = sbr.rel (%p966) target = $region56
    $region55: #{_lambda_.1} parent=5 // pred_region
      %s969 = ssub.s32 %s11, 2
      // Predicated region
      $region57: #{_lambda_.1} parent=55 // pred_check
        %p970 = pneg %p177
      $region58: #{_lambda_.1} parent=55 // pred_check_branch
        %972 = sbr.rel (%p970) target = $region60
      $region59: #{_lambda_.1} parent=55 // pred_region
        %p973 = scmp.lt.s32.totalorder %s22, 1
        %s974 = scalar_select %p973, %s22, 1
        %s975 = smul.addr %s974, 8
        %s976 = scalar_lea.vmem %s5, %s975
      $region60: #{_lambda_.1} parent=55 // pred_fallthru
        _
    $region56: #{_lambda_.1} parent=5 // pred_fallthru
      _
  $region6: #{_lambda_.1} parent=0 // loop_footer
    %s15 = sadd.s32 1, %s11
  $region7: #{_lambda_.1} parent=0 // loop_footer_branch
    %10 = sbr.rel target = $region3
  $region8: #{_lambda_.1} parent=0 // loop_exit
    _

</llo_original>
